<compile_context>
chip_gen: v5e
topology: v5e:2x2
jax: 0.10.0
libtpu: 0.0.40
codegen_flags: <defaults>
</compile_context>

<pallas_src>
import functools

import jax
import jax.numpy as jnp
import numpy as np
from jax.experimental import pallas as pl
from jax.experimental.pallas import tpu as pltpu


def _round_up(v, m):
    return (v + m - 1) // m * m


# ------------------------------- fused kernel ----------------------------------


def _enconv_fused_kernel(s_ref, w_ref, mask_ref, gamma_ref, beta_ref, o_ref,
                         y_scr, sum_scr, ssq_scr, scale_scr, shift_scr,
                         *, tap_offsets, count, eps):
    """Two-phase fused LeakyReLU-conv + training-mode BatchNorm.

    grid = (2, N): axis 0 = phase (0: conv+stats, 1: normalize+store), axis 1 = image.

    Blocks / scratch:
      s_ref      (1, C', Lin)    bf16  space-to-depth input, flattened spatial + tap headroom
      w_ref      (T, Cout, C')   bf16  per-tap weight matrices (T = rh*rw)
      mask_ref   (1, Lpad)       f32   1.0 on valid output lanes, 0.0 on layout-garbage lanes
      gamma/beta (Cout, 1)       f32
      o_ref      (1, Cout, Lpad) f32   normalized output, lane-dense (Lpad % 128 == 0)
      y_scr      (N, Cout, Lpad) f32   persistent conv intermediate (never hits HBM)
      sum/ssq/scale/shift (Cout, 1) f32
    """
    p = pl.program_id(0)
    b = pl.program_id(1)
    cout = o_ref.shape[1]
    lpad = o_ref.shape[2]

    @pl.when(p == 0)
    def _conv_and_stats():
        @pl.when(b == 0)
        def _():
            sum_scr[...] = jnp.zeros_like(sum_scr)
            ssq_scr[...] = jnp.zeros_like(ssq_scr)

        # Conv as tap accumulation: y[:, m] = sum_t W_t @ S[:, m + off_t].
        # rh*rw matmuls of contraction K = C*stride^2 (grouped taps, not K=C split into
        # kh*kw pieces) instead of one matmul on a 4x-inflated im2col matrix.
        acc = jnp.zeros((cout, lpad), jnp.float32)
        for t, off in enumerate(tap_offsets):            # static unroll, static lane offsets
            xt = s_ref[0, :, off:off + lpad]             # (C', Lpad) bf16
            acc = acc + jnp.dot(w_ref[t], xt, preferred_element_type=jnp.float32)
        y_scr[b] = acc

        m = mask_ref[...]                                # (1, Lpad) validity mask
        ym = acc * m
        sum_scr[...] += jnp.sum(ym, axis=1, keepdims=True)
        ssq_scr[...] += jnp.sum(ym * acc, axis=1, keepdims=True)

    @pl.when((p == 1) & (b == 0))
    def _finalize_stats():
        inv_cnt = 1.0 / count
        mean = sum_scr[...] * inv_cnt
        # Clamp: E[y^2] - mean^2 can come out slightly negative from f32 cancellation.
        var = jnp.maximum(ssq_scr[...] * inv_cnt - mean * mean, 0.0)
        inv = gamma_ref[...] * jax.lax.rsqrt(var + eps)
        scale_scr[...] = inv
        shift_scr[...] = beta_ref[...] - mean * inv

    @pl.when(p == 1)
    def _normalize_and_store():
        o_ref[0] = y_scr[b] * scale_scr[...] + shift_scr[...]


# ----------------------------- host-side wrapper -------------------------------


def enconv_pallas(x, conv_w, conv_b, bn_gamma, bn_beta, *, stride, padding,
                  slope=0.2, eps=1e-5):
    """Pallas implementation of Enconv.forward. x: NCHW f32, conv_w: OIHW f32."""
    n, c, h, w = x.shape
    cout, cin, kh, kw = conv_w.shape
    assert cin == c
    s = int(stride)
    # Training-mode BN subtracts the per-channel mean, so the conv bias cancels exactly.
    # TODO(synk): restore conv_b if this is ever reused with eval-mode / running-stats BN.
    del conv_b

    oh = (h + 2 * padding - kh) // s + 1
    ow = (w + 2 * padding - kw) // s + 1
    rh, rw = -(-kh // s), -(-kw // s)          # taps per axis after folding the stride
    khp, kwp = rh * s, rw * s                  # kernel zero-padded up to a stride multiple
    hs, ws = oh + rh - 1, ow + rw - 1          # space-to-depth spatial extent needed
    hp2, wp2 = hs * s, ws * s
    cp = c * s * s                             # channels after space-to-depth
    ntaps = rh * rw

    ls = hs * ws                               # flattened (Ws-strided) spatial length
    lpad = _round_up(ls, 128)                  # lane-dense output lanes per image
    off_max = (rh - 1) * ws + (rw - 1)
    lin = lpad + _round_up(off_max + 1, 128)   # headroom so tap-shifted reads stay in bounds

    # --- host prep: LeakyReLU (f32, exact branch) + pad + space-to-depth + flatten ------
    # Pure elementwise-plus-layout work; XLA fuses it into a single pass over x, and it is
    # ~4x fewer HBM bytes than materializing an im2col patch matrix.
    a = jnp.where(x >= 0, x, slope * x)
    a = jnp.pad(a, ((0, 0), (0, 0),
                    (padding, max(hp2 - h - padding, 0)),
                    (padding, max(wp2 - w - padding, 0))))[:, :, :hp2, :wp2]
    s2d = (a.reshape(n, c, hs, s, ws, s)
             .transpose(0, 1, 3, 5, 2, 4)                # (N, C, dy, dx, Hs, Ws)
             .reshape(n, cp, ls))
    s_in = jnp.pad(s2d, ((0, 0), (0, 0), (0, lin - ls))).astype(jnp.bfloat16)

    # Per-tap weight matrices: W2[t=ry*rw+rx, o, (c,dy,dx)] = w[o, c, ry*s+dy, rx*s+dx].
    w_zp = jnp.zeros((cout, c, khp, kwp), conv_w.dtype).at[:, :, :kh, :kw].set(conv_w)
    w2 = (w_zp.reshape(cout, c, rh, s, rw, s)
              .transpose(2, 4, 0, 1, 3, 5)               # (rh, rw, Cout, C, dy, dx)
              .reshape(ntaps, cout, cp)
              .astype(jnp.bfloat16))
    tap_offsets = tuple((t // rw) * ws + (t % rw) for t in range(ntaps))

    # Valid-lane mask for the Ws-strided output layout (garbage lanes excluded from BN).
    lane = np.arange(lpad)
    mask = jnp.asarray((((lane // ws) < oh) & ((lane % ws) < ow))
                       .astype(np.float32)[None, :])

    gamma = bn_gamma.astype(jnp.float32).reshape(cout, 1)
    beta = bn_beta.astype(jnp.float32).reshape(cout, 1)

    # --- VMEM budget (explicit; one tiling valid on v5e / v6e / v7x) --------------------
    in_blk = cp * lin * 2
    out_blk = cout * lpad * 4
    y_scr_bytes = n * cout * lpad * 4
    const_bytes = ntaps * cout * cp * 2 + lpad * 4 + 4 * cout * 4
    vmem_needed = 2 * (in_blk + out_blk) + const_bytes + y_scr_bytes + 6 * cout * 4
    if y_scr_bytes + 2 * in_blk > 24 * 1024 * 1024:
        # TODO(synk): streaming two-kernel fallback (bf16 intermediate) for activations too
        # large to keep VMEM-resident; every Generator Enconv shape fits the fused path.
        raise NotImplementedError("activation too large for fused VMEM-resident Enconv")
    vmem_limit = min(max(_round_up(vmem_needed + (1 << 20), 1 << 20), 8 << 20), 48 << 20)

    out_flat = pl.pallas_call(
        functools.partial(_enconv_fused_kernel, tap_offsets=tap_offsets,
                          count=float(n * oh * ow), eps=float(eps)),
        out_shape=jax.ShapeDtypeStruct((n, cout, lpad), jnp.float32),
        grid_spec=pltpu.PrefetchScalarGridSpec(
            num_scalar_prefetch=0,
            grid=(2, n),       # (phase, image); phase 0 = conv+stats, phase 1 = BN apply
            in_specs=[
                # phase 0: stream image b; phase 1: stay on the last block (no refetch).
                pl.BlockSpec((1, cp, lin),
                             lambda p, b, nb=n: (b * (1 - p) + p * (nb - 1), 0, 0)),
                pl.BlockSpec((ntaps, cout, cp), lambda p, b: (0, 0, 0)),
                pl.BlockSpec((1, lpad), lambda p, b: (0, 0)),
                pl.BlockSpec((cout, 1), lambda p, b: (0, 0)),
                pl.BlockSpec((cout, 1), lambda p, b: (0, 0)),
            ],
            # Revisited block 0 during phase 0 (never written there), per-image blocks in
            # phase 1 -> each output block is written back to HBM exactly once, lane-dense.
            out_specs=pl.BlockSpec((1, cout, lpad), lambda p, b: (b * p, 0, 0)),
            scratch_shapes=[
                pltpu.VMEM((n, cout, lpad), jnp.float32),   # conv intermediate (on-chip only)
                pltpu.VMEM((cout, 1), jnp.float32),         # channel sum
                pltpu.VMEM((cout, 1), jnp.float32),         # channel sum of squares
                pltpu.VMEM((cout, 1), jnp.float32),         # BN scale
                pltpu.VMEM((cout, 1), jnp.float32),         # BN shift
            ]),
        compiler_params=pltpu.CompilerParams(
            # Global BN statistics serialize the grid.
            # TODO(synk): v7x megacore variant: per-core partial stats + cross-core combine.
            dimension_semantics=("arbitrary", "arbitrary"),
            vmem_limit_bytes=vmem_limit),
    )(s_in, w2, mask, gamma, beta)

    # Crop the Ws-strided, 128-padded lane layout back to NCHW (tiny fused XLA slice).
    return out_flat[:, :, :ls].reshape(n, cout, hs, ws)[:, :, :oh, :ow]


# ----------------------------- pure-JAX reference -------------------------------


def enconv_ref(x, conv_w, conv_b, bn_gamma, bn_beta, *, stride, padding,
               slope=0.2, eps=1e-5):
    a = jnp.where(x >= 0, x, slope * x)
    y = jax.lax.conv_general_dilated(
        a, conv_w, (stride, stride), [(padding, padding), (padding, padding)],
        dimension_numbers=("NCHW", "OIHW", "NCHW"))
    y = y + conv_b[None, :, None, None]
    mean = jnp.mean(y, axis=(0, 2, 3), keepdims=True)
    var = jnp.mean((y - mean) ** 2, axis=(0, 2, 3), keepdims=True)
    return (bn_gamma[None, :, None, None] * (y - mean) / jnp.sqrt(var + eps)
            + bn_beta[None, :, None, None])


# ----------------------------------- main ---------------------------------------


if __name__ == "__main__":
    # Enconv(in_c=4, out_c=8, kernel_size=4, stride=2, padding=1,
    #        activate='LeakyReLU', if_bn=True, if_dropout=False)
    in_c, out_c, ksize, stride, padding = 4, 8, 4, 2, 1
    N, H, W = 2, 16, 16

    key = jax.random.PRNGKey(0)
    kx, kw_, kb, kg, kbe = jax.random.split(key, 5)

    x = jax.random.normal(kx, (N, in_c, H, W), dtype=jnp.float32)
    conv_w = 0.1 * jax.random.normal(kw_, (out_c, in_c, ksize, ksize), dtype=jnp.float32)
    conv_b = 0.1 * jax.random.normal(kb, (out_c,), dtype=jnp.float32)
    bn_gamma = 1.0 + 0.1 * jax.random.normal(kg, (out_c,), dtype=jnp.float32)
    bn_beta = 0.1 * jax.random.normal(kbe, (out_c,), dtype=jnp.float32)

    fwd = jax.jit(functools.partial(enconv_pallas, stride=stride, padding=padding))
    out = jax.block_until_ready(fwd(x, conv_w, conv_b, bn_gamma, bn_beta))

    ref = enconv_ref(x, conv_w, conv_b, bn_gamma, bn_beta,
                     stride=stride, padding=padding)
    # bf16 MXU inputs give ~1e-2-level absolute differences vs. the all-f32 reference;
    # BN keeps outputs O(1) and all accumulation / normalization math is f32.
    np.testing.assert_allclose(np.asarray(out), np.asarray(ref), rtol=2e-2, atol=2e-2)

    print("KERNEL_OK")
</pallas_src>

<mosaic_0001>
module attributes {stable_mosaic.version = 11 : i64} {
  func.func @_enconv_fused_kernel(%arg0: i32, %arg1: i32, %arg2: memref<1x16x256xbf16, #tpu.memory_space<vmem>>, %arg3: memref<4x8x16xbf16, #tpu.memory_space<vmem>>, %arg4: memref<1x128xf32, #tpu.memory_space<vmem>>, %arg5: memref<8x1xf32, #tpu.memory_space<vmem>>, %arg6: memref<8x1xf32, #tpu.memory_space<vmem>>, %arg7: memref<1x8x128xf32, #tpu.memory_space<vmem>>, %arg8: memref<2x8x128xf32, #tpu.memory_space<vmem>>, %arg9: memref<8x1xf32, #tpu.memory_space<vmem>>, %arg10: memref<8x1xf32, #tpu.memory_space<vmem>>, %arg11: memref<8x1xf32, #tpu.memory_space<vmem>>, %arg12: memref<8x1xf32, #tpu.memory_space<vmem>>) attributes {dimension_semantics = [#tpu.dimension_semantics<arbitrary>, #tpu.dimension_semantics<arbitrary>], iteration_bounds = array<i64: 2, 2>, scalar_prefetch = 0 : i64, scratch_operands = 5 : i64, tpu.core_type = #tpu.core_type<tc>, window_params = [{transform_indices = @transform_0, window_bounds = array<i64: 1, 16, 256>}, {pipeline_mode = #tpu.pipeline_mode<synchronous>, transform_indices = @transform_1, window_bounds = array<i64: 4, 8, 16>}, {pipeline_mode = #tpu.pipeline_mode<synchronous>, transform_indices = @transform_2, window_bounds = array<i64: 1, 128>}, {pipeline_mode = #tpu.pipeline_mode<synchronous>, transform_indices = @transform_3, window_bounds = array<i64: 8, 1>}, {pipeline_mode = #tpu.pipeline_mode<synchronous>, transform_indices = @transform_4, window_bounds = array<i64: 8, 1>}, {transform_indices = @transform_5, window_bounds = array<i64: 1, 8, 128>}]} {
    %c0_i32 = arith.constant 0 : i32
    %0 = arith.cmpi eq, %arg0, %c0_i32 : i32
    %1 = arith.extui %0 : i1 to i32
    %c0_i32_0 = arith.constant 0 : i32
    %2 = arith.cmpi ne, %1, %c0_i32_0 : i32
    scf.if %2 {
      %c0_i32_5 = arith.constant 0 : i32
      %11 = arith.cmpi eq, %arg1, %c0_i32_5 : i32
      %12 = arith.extui %11 : i1 to i32
      %c0_i32_6 = arith.constant 0 : i32
      %13 = arith.cmpi ne, %12, %c0_i32_6 : i32
      scf.if %13 {
        %cst_43 = arith.constant 0.000000e+00 : f32
        %57 = vector.broadcast %cst_43 : f32 to vector<8x1xf32>
        %c0_44 = arith.constant 0 : index
        %c0_45 = arith.constant 0 : index
        %58 = vector.load %arg9[%c0_44, %c0_45] : memref<8x1xf32, #tpu.memory_space<vmem>>, vector<8x1xf32>
        tpu.vector_store %arg9[%c0_44, %c0_45], %57 {strides = array<i32>} : memref<8x1xf32, #tpu.memory_space<vmem>>, vector<8x1xf32>,
        %cst_46 = arith.constant 0.000000e+00 : f32
        %59 = vector.broadcast %cst_46 : f32 to vector<8x1xf32>
        %c0_47 = arith.constant 0 : index
        %c0_48 = arith.constant 0 : index
        %60 = vector.load %arg10[%c0_47, %c0_48] : memref<8x1xf32, #tpu.memory_space<vmem>>, vector<8x1xf32>
        tpu.vector_store %arg10[%c0_47, %c0_48], %59 {strides = array<i32>} : memref<8x1xf32, #tpu.memory_space<vmem>>, vector<8x1xf32>,
      } else {
      }
      %cst = arith.constant 0.000000e+00 : f32
      %14 = vector.broadcast %cst : f32 to vector<8x128xf32>
      %c0 = arith.constant 0 : index
      %c0_7 = arith.constant 0 : index
      %c0_8 = arith.constant 0 : index
      %15 = vector.load %arg2[%c0, %c0_7, %c0_8] : memref<1x16x256xbf16, #tpu.memory_space<vmem>>, vector<1x16x128xbf16>
      %16 = vector.shape_cast %15 : vector<1x16x128xbf16> to vector<16x128xbf16>
      %c0_9 = arith.constant 0 : index
      %c0_10 = arith.constant 0 : index
      %c0_11 = arith.constant 0 : index
      %17 = vector.load %arg3[%c0_9, %c0_10, %c0_11] : memref<4x8x16xbf16, #tpu.memory_space<vmem>>, vector<1x8x16xbf16>
      %18 = vector.shape_cast %17 : vector<1x8x16xbf16> to vector<8x16xbf16>
      %cst_12 = arith.constant dense<0.000000e+00> : vector<8x128xf32>
      %19 = tpu.matmul %18, %16, %cst_12 {dimension_numbers = #tpu.dot_dimension_numbers<[1], [0], [0], [1], [0, 0, 1, 1], [], []>} : vector<8x16xbf16>, vector<16x128xbf16>, vector<8x128xf32> -> vector<8x128xf32>
      %20 = arith.addf %14, %19 : vector<8x128xf32>
      %c0_13 = arith.constant 0 : index
      %c0_14 = arith.constant 0 : index
      %c1 = arith.constant 1 : index
      %21 = vector.load %arg2[%c0_13, %c0_14, %c1] : memref<1x16x256xbf16, #tpu.memory_space<vmem>>, vector<1x16x128xbf16>
      %22 = vector.shape_cast %21 : vector<1x16x128xbf16> to vector<16x128xbf16>
      %c1_15 = arith.constant 1 : index
      %c0_16 = arith.constant 0 : index
      %c0_17 = arith.constant 0 : index
      %23 = vector.load %arg3[%c1_15, %c0_16, %c0_17] : memref<4x8x16xbf16, #tpu.memory_space<vmem>>, vector<1x8x16xbf16>
      %24 = vector.shape_cast %23 : vector<1x8x16xbf16> to vector<8x16xbf16>
      %cst_18 = arith.constant dense<0.000000e+00> : vector<8x128xf32>
      %25 = tpu.matmul %24, %22, %cst_18 {dimension_numbers = #tpu.dot_dimension_numbers<[1], [0], [0], [1], [0, 0, 1, 1], [], []>} : vector<8x16xbf16>, vector<16x128xbf16>, vector<8x128xf32> -> vector<8x128xf32>
      %26 = arith.addf %20, %25 : vector<8x128xf32>
      %c0_19 = arith.constant 0 : index
      %c0_20 = arith.constant 0 : index
      %c9 = arith.constant 9 : index
      %27 = vector.load %arg2[%c0_19, %c0_20, %c9] : memref<1x16x256xbf16, #tpu.memory_space<vmem>>, vector<1x16x128xbf16>
      %28 = vector.shape_cast %27 : vector<1x16x128xbf16> to vector<16x128xbf16>
      %c2 = arith.constant 2 : index
      %c0_21 = arith.constant 0 : index
      %c0_22 = arith.constant 0 : index
      %29 = vector.load %arg3[%c2, %c0_21, %c0_22] : memref<4x8x16xbf16, #tpu.memory_space<vmem>>, vector<1x8x16xbf16>
      %30 = vector.shape_cast %29 : vector<1x8x16xbf16> to vector<8x16xbf16>
      %cst_23 = arith.constant dense<0.000000e+00> : vector<8x128xf32>
      %31 = tpu.matmul %30, %28, %cst_23 {dimension_numbers = #tpu.dot_dimension_numbers<[1], [0], [0], [1], [0, 0, 1, 1], [], []>} : vector<8x16xbf16>, vector<16x128xbf16>, vector<8x128xf32> -> vector<8x128xf32>
      %32 = arith.addf %26, %31 : vector<8x128xf32>
      %c0_24 = arith.constant 0 : index
      %c0_25 = arith.constant 0 : index
      %c10 = arith.constant 10 : index
      %33 = vector.load %arg2[%c0_24, %c0_25, %c10] : memref<1x16x256xbf16, #tpu.memory_space<vmem>>, vector<1x16x128xbf16>
      %34 = vector.shape_cast %33 : vector<1x16x128xbf16> to vector<16x128xbf16>
      %c3 = arith.constant 3 : index
      %c0_26 = arith.constant 0 : index
      %c0_27 = arith.constant 0 : index
      %35 = vector.load %arg3[%c3, %c0_26, %c0_27] : memref<4x8x16xbf16, #tpu.memory_space<vmem>>, vector<1x8x16xbf16>
      %36 = vector.shape_cast %35 : vector<1x8x16xbf16> to vector<8x16xbf16>
      %cst_28 = arith.constant dense<0.000000e+00> : vector<8x128xf32>
      %37 = tpu.matmul %36, %34, %cst_28 {dimension_numbers = #tpu.dot_dimension_numbers<[1], [0], [0], [1], [0, 0, 1, 1], [], []>} : vector<8x16xbf16>, vector<16x128xbf16>, vector<8x128xf32> -> vector<8x128xf32>
      %38 = arith.addf %32, %37 : vector<8x128xf32>
      %39 = arith.index_cast %arg1 : i32 to index
      %c0_29 = arith.constant 0 : index
      %c0_30 = arith.constant 0 : index
      %40 = vector.load %arg8[%39, %c0_29, %c0_30] : memref<2x8x128xf32, #tpu.memory_space<vmem>>, vector<1x8x128xf32>
      %41 = vector.shape_cast %40 : vector<1x8x128xf32> to vector<8x128xf32>
      %42 = vector.shape_cast %38 : vector<8x128xf32> to vector<1x8x128xf32>
      tpu.vector_store %arg8[%39, %c0_29, %c0_30], %42 {strides = array<i32>} : memref<2x8x128xf32, #tpu.memory_space<vmem>>, vector<1x8x128xf32>,
      %c0_31 = arith.constant 0 : index
      %c0_32 = arith.constant 0 : index
      %43 = vector.load %arg4[%c0_31, %c0_32] : memref<1x128xf32, #tpu.memory_space<vmem>>, vector<1x128xf32>
      %44 = vector.broadcast %43 : vector<1x128xf32> to vector<8x128xf32>
      %45 = arith.mulf %38, %44 : vector<8x128xf32>
      %c0_33 = arith.constant 0 : index
      %c0_34 = arith.constant 0 : index
      %46 = vector.load %arg9[%c0_33, %c0_34] : memref<8x1xf32, #tpu.memory_space<vmem>>, vector<8x1xf32>
      %cst_35 = arith.constant dense<0.000000e+00> : vector<8xf32>
      %47 = vector.multi_reduction <add>, %45, %cst_35 [1] : vector<8x128xf32> to vector<8xf32>
      %48 = vector.shape_cast %47 : vector<8xf32> to vector<8x1xf32>
      %49 = arith.addf %46, %48 : vector<8x1xf32>
      %c0_36 = arith.constant 0 : index
      %c0_37 = arith.constant 0 : index
      %50 = vector.load %arg9[%c0_36, %c0_37] : memref<8x1xf32, #tpu.memory_space<vmem>>, vector<8x1xf32>
      tpu.vector_store %arg9[%c0_36, %c0_37], %49 {strides = array<i32>} : memref<8x1xf32, #tpu.memory_space<vmem>>, vector<8x1xf32>,
      %c0_38 = arith.constant 0 : index
      %c0_39 = arith.constant 0 : index
      %51 = vector.load %arg10[%c0_38, %c0_39] : memref<8x1xf32, #tpu.memory_space<vmem>>, vector<8x1xf32>
      %52 = arith.mulf %45, %38 : vector<8x128xf32>
      %cst_40 = arith.constant dense<0.000000e+00> : vector<8xf32>
      %53 = vector.multi_reduction <add>, %52, %cst_40 [1] : vector<8x128xf32> to vector<8xf32>
      %54 = vector.shape_cast %53 : vector<8xf32> to vector<8x1xf32>
      %55 = arith.addf %51, %54 : vector<8x1xf32>
      %c0_41 = arith.constant 0 : index
      %c0_42 = arith.constant 0 : index
      %56 = vector.load %arg10[%c0_41, %c0_42] : memref<8x1xf32, #tpu.memory_space<vmem>>, vector<8x1xf32>
      tpu.vector_store %arg10[%c0_41, %c0_42], %55 {strides = array<i32>} : memref<8x1xf32, #tpu.memory_space<vmem>>, vector<8x1xf32>,
    } else {
    }
    %c1_i32 = arith.constant 1 : i32
    %3 = arith.cmpi eq, %arg0, %c1_i32 : i32
    %c0_i32_1 = arith.constant 0 : i32
    %4 = arith.cmpi eq, %arg1, %c0_i32_1 : i32
    %5 = arith.andi %3, %4 : i1
    %6 = arith.extui %5 : i1 to i32
    %c0_i32_2 = arith.constant 0 : i32
    %7 = arith.cmpi ne, %6, %c0_i32_2 : i32
    scf.if %7 {
      %c0 = arith.constant 0 : index
      %c0_5 = arith.constant 0 : index
      %11 = vector.load %arg9[%c0, %c0_5] : memref<8x1xf32, #tpu.memory_space<vmem>>, vector<8x1xf32>
      %cst = arith.constant 7.812500e-03 : f32
      %12 = vector.broadcast %cst : f32 to vector<8x1xf32>
      %13 = arith.mulf %11, %12 : vector<8x1xf32>
      %c0_6 = arith.constant 0 : index
      %c0_7 = arith.constant 0 : index
      %14 = vector.load %arg10[%c0_6, %c0_7] : memref<8x1xf32, #tpu.memory_space<vmem>>, vector<8x1xf32>
      %cst_8 = arith.constant 7.812500e-03 : f32
      %15 = vector.broadcast %cst_8 : f32 to vector<8x1xf32>
      %16 = arith.mulf %14, %15 : vector<8x1xf32>
      %17 = arith.mulf %13, %13 : vector<8x1xf32>
      %18 = arith.subf %16, %17 : vector<8x1xf32>
      %cst_9 = arith.constant 0.000000e+00 : f32
      %19 = vector.broadcast %cst_9 : f32 to vector<8x1xf32>
      %20 = arith.maximumf %18, %19 : vector<8x1xf32>
      %c0_10 = arith.constant 0 : index
      %c0_11 = arith.constant 0 : index
      %21 = vector.load %arg5[%c0_10, %c0_11] : memref<8x1xf32, #tpu.memory_space<vmem>>, vector<8x1xf32>
      %cst_12 = arith.constant 9.99999974E-6 : f32
      %22 = vector.broadcast %cst_12 : f32 to vector<8x1xf32>
      %23 = arith.addf %20, %22 : vector<8x1xf32>
      %24 = math.rsqrt %23 : vector<8x1xf32>
      %25 = arith.mulf %21, %24 : vector<8x1xf32>
      %c0_13 = arith.constant 0 : index
      %c0_14 = arith.constant 0 : index
      %26 = vector.load %arg11[%c0_13, %c0_14] : memref<8x1xf32, #tpu.memory_space<vmem>>, vector<8x1xf32>
      tpu.vector_store %arg11[%c0_13, %c0_14], %25 {strides = array<i32>} : memref<8x1xf32, #tpu.memory_space<vmem>>, vector<8x1xf32>,
      %c0_15 = arith.constant 0 : index
      %c0_16 = arith.constant 0 : index
      %27 = vector.load %arg6[%c0_15, %c0_16] : memref<8x1xf32, #tpu.memory_space<vmem>>, vector<8x1xf32>
      %28 = arith.mulf %13, %25 : vector<8x1xf32>
      %29 = arith.subf %27, %28 : vector<8x1xf32>
      %c0_17 = arith.constant 0 : index
      %c0_18 = arith.constant 0 : index
      %30 = vector.load %arg12[%c0_17, %c0_18] : memref<8x1xf32, #tpu.memory_space<vmem>>, vector<8x1xf32>
      tpu.vector_store %arg12[%c0_17, %c0_18], %29 {strides = array<i32>} : memref<8x1xf32, #tpu.memory_space<vmem>>, vector<8x1xf32>,
    } else {
    }
    %c1_i32_3 = arith.constant 1 : i32
    %8 = arith.cmpi eq, %arg0, %c1_i32_3 : i32
    %9 = arith.extui %8 : i1 to i32
    %c0_i32_4 = arith.constant 0 : i32
    %10 = arith.cmpi ne, %9, %c0_i32_4 : i32
    scf.if %10 {
      %11 = arith.index_cast %arg1 : i32 to index
      %c0 = arith.constant 0 : index
      %c0_5 = arith.constant 0 : index
      %12 = vector.load %arg8[%11, %c0, %c0_5] : memref<2x8x128xf32, #tpu.memory_space<vmem>>, vector<1x8x128xf32>
      %13 = vector.shape_cast %12 : vector<1x8x128xf32> to vector<8x128xf32>
      %c0_6 = arith.constant 0 : index
      %c0_7 = arith.constant 0 : index
      %14 = vector.load %arg11[%c0_6, %c0_7] : memref<8x1xf32, #tpu.memory_space<vmem>>, vector<8x1xf32>
      %15 = vector.broadcast %14 : vector<8x1xf32> to vector<8x128xf32>
      %16 = arith.mulf %13, %15 : vector<8x128xf32>
      %c0_8 = arith.constant 0 : index
      %c0_9 = arith.constant 0 : index
      %17 = vector.load %arg12[%c0_8, %c0_9] : memref<8x1xf32, #tpu.memory_space<vmem>>, vector<8x1xf32>
      %18 = vector.broadcast %17 : vector<8x1xf32> to vector<8x128xf32>
      %19 = arith.addf %16, %18 : vector<8x128xf32>
      %c0_10 = arith.constant 0 : index
      %c0_11 = arith.constant 0 : index
      %c0_12 = arith.constant 0 : index
      %20 = vector.load %arg7[%c0_10, %c0_11, %c0_12] : memref<1x8x128xf32, #tpu.memory_space<vmem>>, vector<1x8x128xf32>
      %21 = vector.shape_cast %20 : vector<1x8x128xf32> to vector<8x128xf32>
      %22 = vector.shape_cast %19 : vector<8x128xf32> to vector<1x8x128xf32>
      tpu.vector_store %arg7[%c0_10, %c0_11, %c0_12], %22 {strides = array<i32>} : memref<1x8x128xf32, #tpu.memory_space<vmem>>, vector<1x8x128xf32>,
    } else {
    }
    return
  }
  func.func @transform_0(%arg0: i32, %arg1: i32) -> (i32, i32, i32) {
    %c1_i32 = arith.constant 1 : i32
    %0 = arith.subi %c1_i32, %arg0 : i32
    %1 = arith.muli %arg1, %0 : i32
    %c1_i32_0 = arith.constant 1 : i32
    %2 = arith.muli %arg0, %c1_i32_0 : i32
    %3 = arith.addi %1, %2 : i32
    %c0_i32 = arith.constant 0 : i32
    %c0_i32_1 = arith.constant 0 : i32
    %c0_i32_2 = arith.constant 0 : i32
    return %3, %c0_i32, %c0_i32_1 : i32, i32, i32
  }
  func.func @transform_1(%arg0: i32, %arg1: i32) -> (i32, i32, i32) {
    %c0_i32 = arith.constant 0 : i32
    %c0_i32_0 = arith.constant 0 : i32
    %c0_i32_1 = arith.constant 0 : i32
    %c0_i32_2 = arith.constant 0 : i32
    return %c0_i32, %c0_i32_0, %c0_i32_1 : i32, i32, i32
  }
  func.func @transform_2(%arg0: i32, %arg1: i32) -> (i32, i32) {
    %c0_i32 = arith.constant 0 : i32
    %c0_i32_0 = arith.constant 0 : i32
    %c0_i32_1 = arith.constant 0 : i32
    return %c0_i32, %c0_i32_0 : i32, i32
  }
  func.func @transform_3(%arg0: i32, %arg1: i32) -> (i32, i32) {
    %c0_i32 = arith.constant 0 : i32
    %c0_i32_0 = arith.constant 0 : i32
    %c0_i32_1 = arith.constant 0 : i32
    return %c0_i32, %c0_i32_0 : i32, i32
  }
  func.func @transform_4(%arg0: i32, %arg1: i32) -> (i32, i32) {
    %c0_i32 = arith.constant 0 : i32
    %c0_i32_0 = arith.constant 0 : i32
    %c0_i32_1 = arith.constant 0 : i32
    return %c0_i32, %c0_i32_0 : i32, i32
  }
  func.func @transform_5(%arg0: i32, %arg1: i32) -> (i32, i32, i32) {
    %0 = arith.muli %arg1, %arg0 : i32
    %c0_i32 = arith.constant 0 : i32
    %c0_i32_0 = arith.constant 0 : i32
    %c0_i32_1 = arith.constant 0 : i32
    return %0, %c0_i32, %c0_i32_0 : i32, i32, i32
  }
}

</mosaic_0001>

<llo_original>
// kernel: enconv_pallas.1
$region0: #{enconv_pallas.1}
  #allocation0 [shape = 'u32[]', space=smem, size = 0x4, offset = 0x4, fixed_abs, tag = 'smem constant byte address 0x4 - core index']
  #allocation1 [shape = 'u32[72,128]{1,0:T(1,128)}', space=vmem, size = 0x9000, scoped, tag = 'internal scratch']
  #allocation2 [shape = 'f32[2,8,128]{2,1,0:T(8,128)}', space=vmem, size = 0x2000, scoped, tag = 'scratch operand']
  #allocation3 [shape = 'f32[8,1]{1,0:T(8,128)}', space=vmem, size = 0x1000, scoped, tag = 'scratch operand']
  #allocation4 [shape = 'f32[8,1]{1,0:T(8,128)}', space=vmem, size = 0x1000, scoped, tag = 'scratch operand']
  #allocation5 [shape = 'f32[8,1]{1,0:T(8,128)}', space=vmem, size = 0x1000, scoped, tag = 'scratch operand']
  #allocation6 [shape = 'f32[8,1]{1,0:T(8,128)}', space=vmem, size = 0x1000, scoped, tag = 'scratch operand']
  %s0 = inlined_call_operand.vmem [shape: bf16[2,16,256], index: 0, kind: input, shape index: {}]
  %s1 = inlined_call_operand.vmem [shape: bf16[4,8,16], index: 1, kind: input, shape index: {}]
  %s2 = inlined_call_operand.vmem [shape: f32[1,128], index: 2, kind: input, shape index: {}]
  %s3 = inlined_call_operand.vmem [shape: f32[8,1], index: 3, kind: input, shape index: {}]
  %s4 = inlined_call_operand.vmem [shape: f32[8,1], index: 4, kind: input, shape index: {}]
  %s5 = inlined_call_operand.vmem [shape: f32[2,8,128], index: 5, kind: output, shape index: {}]
  %s6 = sld [smem:[#allocation0]]
  $region69: #{enconv_pallas.1} parent=0
    _
  %s8 = ssub.s32 1, %s6
  %s9 = scalar_select 0, %s8, %s6
  loop: start=0, step=1, limit=6
  $region2: #{enconv_pallas.1} parent=0 // loop_pre_header
    _
  $region3: #{enconv_pallas.1} parent=0 // loop_header
    %s11 = sphi 0, %s15
    %p12 = scmp.ge.s32.totalorder %s11, 6
    %s18 = sphi 0, %s30
    %s19 = sphi 0, %s26
    %s20 = sphi 0, %s18
    %s21 = sphi 0, %s19
    %s22 = sphi 0, %s20
    %s23 = sphi 0, %s21
    %s39 = sphi 0, %s41
    %s42 = sphi 0, %s39
    %s43 = sphi 0, %s42
    %s59 = sphi 0, %s43
    %s63 = sphi 0, %s63
    %s65 = sphi 0, %s63
    %s66 = sphi 0, %s65
    %s80 = sphi 0, %s66
    %s84 = sphi 0, %s84
    %s86 = sphi 0, %s84
    %s87 = sphi 0, %s86
    %s101 = sphi 0, %s87
    %s105 = sphi 0, %s105
    %s107 = sphi 0, %s105
    %s108 = sphi 0, %s107
    %s122 = sphi 0, %s108
    %s126 = sphi 0, %s126
    %s128 = sphi 0, %s126
    %s129 = sphi 0, %s128
    %s143 = sphi 0, %s129
    %s151 = sphi 0, %s153
    %s154 = sphi 0, %s151
    %s155 = sphi 0, %s154
    %s171 = sphi 0, %s155
  $region4: #{enconv_pallas.1} parent=0 // loop_header_branch
    %14 = sbr.rel (%p12) target = $region8
  $region5: #{enconv_pallas.1} parent=0 // loop_body
    %s16 = ssub.s32 %s11, 1
    %s17 = ssub.s32 %s11, 2
    %s24 = sadd.s32 1, %s19
    %p25 = scmp.ge.s32.totalorder %s24, 2
    %s26 = scalar_select %p25, 0, %s24
    %s27 = sadd.s32 1, %s18
    %s28 = scalar_select %p25, %s27, %s18
    %p29 = scmp.ge.s32.totalorder %s28, 2
    %s30 = scalar_select %p29, 0, %s28
    %s31 = ssub.s32 1, %s18
    %s32 = smul.u32 %s19, %s31
    %s33 = sadd.s32 %s32, %s18
    %s34 = ssub.s32 1, %s30
    %s35 = smul.u32 %s26, %s34
    %s36 = sadd.s32 %s35, %s30
    %s37 = ssub.s32 %s33, %s36
    %p38 = scmp.eq.s32.totalorder %s37, 0
    %s40 = sadd.s32 %s39, 1
    %s41 = scalar_select %p38, %s39, %s40
    %p44 = pneg %p38
    %p45 = scmp.eq.s32.totalorder %s11, 3
    %p46 = por %p44, %p45
    %p47 = scmp.ne.s32.totalorder %s39, %s42
    %p48 = scmp.eq.s32.totalorder %s11, 0
    %p49 = por %p47, %p48
    %p50 = scmp.ne.s32.totalorder %s39, %s42
    %p51 = scmp.eq.s32.totalorder %s16, 3
    %p52 = por %p50, %p51
    %p53 = scmp.ne.s32.totalorder %s42, %s43
    %p54 = scmp.eq.s32.totalorder %s16, 0
    %p55 = por %p53, %p54
    %p56 = scmp.ne.s32.totalorder %s42, %s43
    %p57 = scmp.eq.s32.totalorder %s17, 3
    %p58 = por %p56, %p57
    %p60 = scmp.ne.s32.totalorder %s43, %s59
    %p61 = scmp.eq.s32.totalorder %s17, 0
    %p62 = por %p60, %p61
    %s64 = sadd.s32 %s63, 1
    %p67 = scmp.eq.s32.totalorder %s11, 3
    %p68 = scmp.ne.s32.totalorder %s63, %s65
    %p69 = scmp.eq.s32.totalorder %s11, 0
    %p70 = por %p68, %p69
    %p71 = scmp.ne.s32.totalorder %s63, %s65
    %p72 = scmp.eq.s32.totalorder %s16, 3
    %p73 = por %p71, %p72
    %p74 = scmp.ne.s32.totalorder %s65, %s66
    %p75 = scmp.eq.s32.totalorder %s16, 0
    %p76 = por %p74, %p75
    %p77 = scmp.ne.s32.totalorder %s65, %s66
    %p78 = scmp.eq.s32.totalorder %s17, 3
    %p79 = por %p77, %p78
    %p81 = scmp.ne.s32.totalorder %s66, %s80
    %p82 = scmp.eq.s32.totalorder %s17, 0
    %p83 = por %p81, %p82
    %s85 = sadd.s32 %s84, 1
    %p88 = scmp.eq.s32.totalorder %s11, 3
    %p89 = scmp.ne.s32.totalorder %s84, %s86
    %p90 = scmp.eq.s32.totalorder %s11, 0
    %p91 = por %p89, %p90
    %p92 = scmp.ne.s32.totalorder %s84, %s86
    %p93 = scmp.eq.s32.totalorder %s16, 3
    %p94 = por %p92, %p93
    %p95 = scmp.ne.s32.totalorder %s86, %s87
    %p96 = scmp.eq.s32.totalorder %s16, 0
    %p97 = por %p95, %p96
    %p98 = scmp.ne.s32.totalorder %s86, %s87
    %p99 = scmp.eq.s32.totalorder %s17, 3
    %p100 = por %p98, %p99
    %p102 = scmp.ne.s32.totalorder %s87, %s101
    %p103 = scmp.eq.s32.totalorder %s17, 0
    %p104 = por %p102, %p103
    %s106 = sadd.s32 %s105, 1
    %p109 = scmp.eq.s32.totalorder %s11, 3
    %p110 = scmp.ne.s32.totalorder %s105, %s107
    %p111 = scmp.eq.s32.totalorder %s11, 0
    %p112 = por %p110, %p111
    %p113 = scmp.ne.s32.totalorder %s105, %s107
    %p114 = scmp.eq.s32.totalorder %s16, 3
    %p115 = por %p113, %p114
    %p116 = scmp.ne.s32.totalorder %s107, %s108
    %p117 = scmp.eq.s32.totalorder %s16, 0
    %p118 = por %p116, %p117
    %p119 = scmp.ne.s32.totalorder %s107, %s108
    %p120 = scmp.eq.s32.totalorder %s17, 3
    %p121 = por %p119, %p120
    %p123 = scmp.ne.s32.totalorder %s108, %s122
    %p124 = scmp.eq.s32.totalorder %s17, 0
    %p125 = por %p123, %p124
    %s127 = sadd.s32 %s126, 1
    %p130 = scmp.eq.s32.totalorder %s11, 3
    %p131 = scmp.ne.s32.totalorder %s126, %s128
    %p132 = scmp.eq.s32.totalorder %s11, 0
    %p133 = por %p131, %p132
    %p134 = scmp.ne.s32.totalorder %s126, %s128
    %p135 = scmp.eq.s32.totalorder %s16, 3
    %p136 = por %p134, %p135
    %p137 = scmp.ne.s32.totalorder %s128, %s129
    %p138 = scmp.eq.s32.totalorder %s16, 0
    %p139 = por %p137, %p138
    %p140 = scmp.ne.s32.totalorder %s128, %s129
    %p141 = scmp.eq.s32.totalorder %s17, 3
    %p142 = por %p140, %p141
    %p144 = scmp.ne.s32.totalorder %s129, %s143
    %p145 = scmp.eq.s32.totalorder %s17, 0
    %p146 = por %p144, %p145
    %s147 = smul.u32 %s19, %s18
    %s148 = smul.u32 %s26, %s30
    %s149 = ssub.s32 %s147, %s148
    %p150 = scmp.eq.s32.totalorder %s149, 0
    %s152 = sadd.s32 %s151, 1
    %s153 = scalar_select %p150, %s151, %s152
    %p156 = pneg %p150
    %p157 = scmp.eq.s32.totalorder %s11, 3
    %p158 = por %p156, %p157
    %p159 = scmp.ne.s32.totalorder %s151, %s154
    %p160 = scmp.eq.s32.totalorder %s11, 0
    %p161 = por %p159, %p160
    %p162 = scmp.ne.s32.totalorder %s151, %s154
    %p163 = scmp.eq.s32.totalorder %s16, 3
    %p164 = por %p162, %p163
    %p165 = scmp.ne.s32.totalorder %s154, %s155
    %p166 = scmp.eq.s32.totalorder %s16, 0
    %p167 = por %p165, %p166
    %p168 = scmp.ne.s32.totalorder %s154, %s155
    %p169 = scmp.eq.s32.totalorder %s17, 3
    %p170 = por %p168, %p169
    %p172 = scmp.ne.s32.totalorder %s155, %s171
    %p173 = scmp.eq.s32.totalorder %s17, 0
    %p174 = por %p172, %p173
    %p175 = scmp.le.s32.totalorder 1, %s11
    %p176 = scmp.lt.s32.totalorder %s11, 5
    %p177 = pnand %p175, %p176
    %p178 = pneg %p177
    // Predicated region
    $region9: #{enconv_pallas.1} parent=5 // pred_check
      _
    $region10: #{enconv_pallas.1} parent=5 // pred_check_branch
      %180 = sbr.rel (%p177) target = $region12
    $region11: #{enconv_pallas.1} parent=5 // pred_region
      %s181 = ssub.s32 %s11, 1
      // Predicated region
      $region13: #{enconv_pallas.1} parent=11 // pred_check
        %p182 = pneg %p76
      $region14: #{enconv_pallas.1} parent=11 // pred_check_branch
        %184 = sbr.rel (%p182) target = $region16
      $region15: #{enconv_pallas.1} parent=11 // pred_region
        _
      $region16: #{enconv_pallas.1} parent=11 // pred_fallthru
        _
      // Predicated region
      $region17: #{enconv_pallas.1} parent=11 // pred_check
        %p185 = pneg %p97
      $region18: #{enconv_pallas.1} parent=11 // pred_check_branch
        %187 = sbr.rel (%p185) target = $region20
      $region19: #{enconv_pallas.1} parent=11 // pred_region
        _
      $region20: #{enconv_pallas.1} parent=11 // pred_fallthru
        _
      // Predicated region
      $region21: #{enconv_pallas.1} parent=11 // pred_check
        %p188 = pneg %p118
      $region22: #{enconv_pallas.1} parent=11 // pred_check_branch
        %190 = sbr.rel (%p188) target = $region24
      $region23: #{enconv_pallas.1} parent=11 // pred_region
        _
      $region24: #{enconv_pallas.1} parent=11 // pred_fallthru
        _
      // Predicated region
      $region25: #{enconv_pallas.1} parent=11 // pred_check
        %p191 = pneg %p139
      $region26: #{enconv_pallas.1} parent=11 // pred_check_branch
        %193 = sbr.rel (%p191) target = $region28
      $region27: #{enconv_pallas.1} parent=11 // pred_region
        _
      $region28: #{enconv_pallas.1} parent=11 // pred_fallthru
        _
    $region12: #{enconv_pallas.1} parent=5 // pred_fallthru
      _
    %p194 = scmp.lt.s32.totalorder %s11, 4
    // Predicated region
    $region29: #{enconv_pallas.1} parent=5 // pred_check
      %p195 = pneg %p194
    $region30: #{enconv_pallas.1} parent=5 // pred_check_branch
      %197 = sbr.rel (%p195) target = $region32
    $region31: #{enconv_pallas.1} parent=5 // pred_region
      // Predicated region
      $region33: #{enconv_pallas.1} parent=31 // pred_check
        %p198 = pneg %p49
      $region34: #{enconv_pallas.1} parent=31 // pred_check_branch
        %200 = sbr.rel (%p198) target = $region36
      $region35: #{enconv_pallas.1} parent=31 // pred_region
        %s201 = ssub.s32 1, %s18
        %s202 = smul.u32 %s19, %s201
        %s203 = sadd.s32 %s202, %s18
        %p204 = scmp.lt.s32.totalorder %s203, 1
        %s205 = scalar_select %p204, %s203, 1
        %s206 = smul.addr %s205, 4
        %s207 = smul.addr %s206, 4
        %s208 = scalar_lea.vmem %s0, %s207
        %s209 = ssub.s32 1, %s18
        %s210 = smul.u32 %s19, %s209
        %s211 = sadd.s32 %s210, %s18
      $region36: #{enconv_pallas.1} parent=31 // pred_fallthru
        _
    $region32: #{enconv_pallas.1} parent=5 // pred_fallthru
      _
    %p212 = scmp.le.s32.totalorder 1, %s11
    %p213 = scmp.lt.s32.totalorder %s11, 5
    %p214 = pnand %p212, %p213
    %p215 = pneg %p214
    // Predicated region
    $region37: #{enconv_pallas.1} parent=5 // pred_check
      _
    $region38: #{enconv_pallas.1} parent=5 // pred_check_branch
      %217 = sbr.rel (%p214) target = $region40
    $region39: #{enconv_pallas.1} parent=5 // pred_region
      %s218 = ssub.s32 %s11, 1
      %s219 = ssub.s32 1, %s20
      %s220 = smul.u32 %s21, %s219
      %s221 = sadd.s32 %s220, %s20
      %p222 = scmp.lt.s32.totalorder %s221, 1
      %s223 = scalar_select %p222, %s221, 1
      %s224 = smul.addr %s223, 4
      %s225 = smul.addr %s224, 4
      %s226 = scalar_lea.vmem %s0, %s225
      %p227 = pneg %p55
      %p228 = pneg %p52
      %p229 = pneg %p76
      %p230 = pneg %p73
      %p231 = pneg %p97
      %p232 = pneg %p94
      %p233 = pneg %p118
      %p234 = pneg %p115
      %p235 = pneg %p139
      %p236 = pneg %p136
      %p237 = pneg %p167
      %p238 = pneg %p164
      %s239 = smul.u32 %s21, %s20
      %p240 = scmp.lt.s32.totalorder %s239, 1
      %s241 = scalar_select %p240, %s239, 1
      %s242 = smul.addr %s241, 8
      %s243 = scalar_lea.vmem %s5, %s242
      %s244 = ssub.s32 1, %s20
      %s245 = smul.u32 %s21, %s244
      %s246 = sadd.s32 %s245, %s20
      %p247 = scmp.lt.s32.totalorder %s246, 1
      %s248 = scalar_select %p247, %s246, 1
      %s249 = smul.addr %s248, 4
      %s250 = smul.addr %s249, 4
      %s251 = scalar_lea.vmem %s0, %s250
      %s252 = ssub.s32 1, %s20
      %s253 = smul.u32 %s21, %s252
      %s254 = sadd.s32 %s253, %s20
      %s255 = smul.u32 %s21, %s20
      %p256 = scmp.lt.s32.totalorder %s255, 1
      %s257 = scalar_select %p256, %s255, 1
      %s258 = smul.addr %s257, 8
      %s259 = scalar_lea.vmem %s5, %s258
      %s260 = smul.u32 %s21, %s20
      %p262 = scmp.eq.s32.totalorder %s20, 0
      // Predicated region
      $region41: #{enconv_pallas.1} parent=39 // pred_check
        %p263 = pneg %p262
      $region42: #{enconv_pallas.1} parent=39 // pred_check_branch
        %265 = sbr.rel (%p263) target = $region44
      $region43: #{enconv_pallas.1} parent=39 // pred_region
        %p266 = scmp.eq.s32.totalorder %s21, 0
        // Predicated region
        $region45: #{enconv_pallas.1} parent=43 // pred_check
          %p267 = pneg %p266
        $region46: #{enconv_pallas.1} parent=43 // pred_check_branch
          %269 = sbr.rel (%p267) target = $region48
        $region47: #{enconv_pallas.1} parent=43 // pred_region
          %vm270 = vcmask 7168
          %271 = vst.msk [vmem:[#allocation3] sm:$0xff] %vm270, 0.0
          %272 = vst.msk [vmem:[#allocation4] sm:$0xff] %vm270, 0.0
        $region48: #{enconv_pallas.1} parent=43 // pred_fallthru
          _
        %v273 = vld [vmem:[%s251] sm:$0xf]
        %v274 = vld [vmem:[%s251 + $0x8] sm:$0xf]
        %v275 = vld [vmem:[%s1] sm:$0xf]
        %v276 = vld [vmem:[%s251] sm:$0xff]
        %v277 = vld [vmem:[%s251 + $0x8] sm:$0xff]
        %s278 = scalar_lea.vmem %s1, 4
        %v279 = vld [vmem:[%s278] sm:$0xf]
        %v282 = vunpack.c.l.b16 %v276
        %v283 = vunpack.c.h.b16 %v276
        %v284 = vunpack.c.l.b16 %v277
        %v285 = vunpack.c.h.b16 %v277
        %v286 = vpack.c.b16 %v284, %v282
        %v287 = vpack.c.b16 %v285, %v283
        %288 = vrot.lane.b32.xlu0 %v286, 127
        %v289 = vpop.permute.xlu0 %288
        %290 = vrot.lane.b32.xlu0 %v287, 127
        %v291 = vpop.permute.xlu0 %290
        %vm292 = vcmask 1039360
        %v293 = vsel %vm292, %v289, %v291
        %vm295 = vcmask 130048
        %v297 = vsel %vm295, %v279, 0
        %299 = vmatpush.bf16.msra.mxu0 0
        %300 = vmatpush.bf16.msra.mxu0 0
        %301 = vmatpush.bf16.msra.mxu0 0
        %302 = vmatpush.bf16.msra.mxu0 0
        %303 = vmatpush.bf16.msra.mxu0 0
        %304 = vmatpush.bf16.msra.mxu0 0
        %305 = vmatpush.bf16.msra.mxu0 0
        %306 = vmatpush.bf16.msra.mxu0 %v293
        %307 = vmatmul.bf16.gmra.mxu0 %v297
        %v308 = vpop.f32.mrf.mxu0
        %v309 = vadd.f32 0.0, %v308
        %v310 = vpop.f32.mrf.mxu0
        %311 = vdwg.mxu0
        %v314 = vunpack.c.l.b16 %v273
        %v315 = vunpack.c.l.b16 %v274
        %v316 = vpack.c.b16 %v315, %v314
        %v319 = vsel %vm295, %v275, 0
        %321 = vmatpush.bf16.msra.mxu0 0
        %322 = vmatpush.bf16.msra.mxu0 0
        %323 = vmatpush.bf16.msra.mxu0 0
        %324 = vmatpush.bf16.msra.mxu0 0
        %325 = vmatpush.bf16.msra.mxu0 0
        %326 = vmatpush.bf16.msra.mxu0 0
        %327 = vmatpush.bf16.msra.mxu0 0
        %328 = vmatpush.bf16.msra.mxu0 %v316
        %329 = vmatmul.bf16.gmra.mxu0 %v319
        %v330 = vpop.f32.mrf.mxu0
        %v331 = vadd.f32 %v309, %v330
        %v332 = vpop.f32.mrf.mxu0
        %333 = vdwg.mxu0
        %s334 = scalar_lea.vmem %s1, 8
        %v335 = vld [vmem:[%s334] sm:$0xf]
        %336 = vrot.lane.b32.xlu0 %v286, 119
        %v337 = vpop.permute.xlu0 %336
        %338 = vrot.lane.b32.xlu0 %v287, 119
        %v339 = vpop.permute.xlu0 %338
        %vm340 = vcmask 973824
        %v341 = vsel %vm340, %v337, %v339
        %v344 = vsel %vm295, %v335, 0
        %346 = vmatpush.bf16.msra.mxu0 0
        %347 = vmatpush.bf16.msra.mxu0 0
        %348 = vmatpush.bf16.msra.mxu0 0
        %349 = vmatpush.bf16.msra.mxu0 0
        %350 = vmatpush.bf16.msra.mxu0 0
        %351 = vmatpush.bf16.msra.mxu0 0
        %352 = vmatpush.bf16.msra.mxu0 0
        %353 = vmatpush.bf16.msra.mxu0 %v341
        %354 = vmatmul.bf16.gmra.mxu0 %v344
        %v355 = vpop.f32.mrf.mxu0
        %v356 = vadd.f32 0.0, %v355
        %v357 = vpop.f32.mrf.mxu0
        %358 = vdwg.mxu0
        %v359 = vadd.f32 %v331, %v356
        %s360 = scalar_lea.vmem %s1, 12
        %v361 = vld [vmem:[%s360] sm:$0xf]
        %362 = vrot.lane.b32.xlu0 %v286, 118
        %v363 = vpop.permute.xlu0 %362
        %364 = vrot.lane.b32.xlu0 %v287, 118
        %v365 = vpop.permute.xlu0 %364
        %vm366 = vcmask 965632
        %v367 = vsel %vm366, %v363, %v365
        %v370 = vsel %vm295, %v361, 0
        %372 = vmatpush.bf16.msra.mxu0 0
        %373 = vmatpush.bf16.msra.mxu0 0
        %374 = vmatpush.bf16.msra.mxu0 0
        %375 = vmatpush.bf16.msra.mxu0 0
        %376 = vmatpush.bf16.msra.mxu0 0
        %377 = vmatpush.bf16.msra.mxu0 0
        %378 = vmatpush.bf16.msra.mxu0 0
        %379 = vmatpush.bf16.msra.mxu0 %v367
        %380 = vmatmul.bf16.gmra.mxu0 %v370
        %v381 = vpop.f32.mrf.mxu0
        %v382 = vadd.f32 0.0, %v381
        %v383 = vpop.f32.mrf.mxu0
        %384 = vdwg.mxu0
        %v385 = vadd.f32 %v359, %v382
        %s386 = smul.u32 %s21, 8
        %s387 = scalar_lea.vmem [#allocation2], %s386
        %388 = vst [vmem:[%s387] sm:$0xff] %v385
        %v389 = vld [vmem:[%s2] sm:$0x1]
        %v391 = vperm.slane %v389, 0
        %v393 = vmul.f32 %v385, %v391
        %v394 = vld [vmem:[#allocation3] sm:$0xff]
        %395 = vadd.xlane.f32.xlu0 %v393
        %v396 = vpop.xlane.xlu0 %395
        %v397 = vadd.f32 %v394, %v396
        %vm398 = vcmask 7168
        %399 = vst.msk [vmem:[#allocation3] sm:$0xff] %vm398, %v397
        %v400 = vld [vmem:[#allocation4] sm:$0xff]
        %v401 = vmul.f32 %v393, %v385
        %402 = vadd.xlane.f32.xlu0 %v401
        %v403 = vpop.xlane.xlu0 %402
        %v404 = vadd.f32 %v400, %v403
        %405 = vst.msk [vmem:[#allocation4] sm:$0xff] %vm398, %v404
      $region44: #{enconv_pallas.1} parent=39 // pred_fallthru
        _
      %p406 = scmp.eq.s32.totalorder %s20, 1
      %p407 = scmp.eq.s32.totalorder %s21, 0
      %p408 = pnand %p406, %p407
      %p409 = pneg %p408
      // Predicated region
      $region49: #{enconv_pallas.1} parent=39 // pred_check
        _
      $region50: #{enconv_pallas.1} parent=39 // pred_check_branch
        %411 = sbr.rel (%p408) target = $region52
      $region51: #{enconv_pallas.1} parent=39 // pred_region
        %v412 = vld [vmem:[#allocation3] sm:$0xff]
        %v413 = vmul.f32 %v412, 0.0078125
        %v414 = vld [vmem:[#allocation4] sm:$0xff]
        %v415 = vmul.f32 %v414, 0.0078125
        %v416 = vmul.f32 %v413, %v413
        %v417 = vsub.f32 %v415, %v416
        %v418 = vmax.f32 %v417, 0.0
        %v419 = vld [vmem:[%s3] sm:$0xff]
        %v420 = vadd.f32 %v418, 1e-05
        %v421 = vrsqrt.pop %v420
        %v422 = vmul.f32 %v421, %v420
        %v423 = vmul.f32 %v422, %v421
        %v424 = vmul.f32 0.5, %v423
        %v425 = vsub.f32 1.5, %v424
        %v426 = vmul.f32 %v421, %v425
        %vm427 = vweird.f32 %v420
        %vm428 = vweird.f32 %v421
        %vm429 = vmor %vm427, %vm428
        %v430 = vsel %vm429, %v421, %v426
        %v431 = vmul.f32 %v419, %v430
        %vm432 = vcmask 7168
        %433 = vst.msk [vmem:[#allocation5] sm:$0xff] %vm432, %v431
        %v434 = vld [vmem:[%s4] sm:$0xff]
        %v435 = vmul.f32 %v413, %v431
        %v436 = vsub.f32 %v434, %v435
        %437 = vst.msk [vmem:[#allocation6] sm:$0xff] %vm432, %v436
      $region52: #{enconv_pallas.1} parent=39 // pred_fallthru
        _
      // Predicated region
      $region53: #{enconv_pallas.1} parent=39 // pred_check
        %p438 = pneg %p406
      $region54: #{enconv_pallas.1} parent=39 // pred_check_branch
        %440 = sbr.rel (%p438) target = $region56
      $region55: #{enconv_pallas.1} parent=39 // pred_region
        %s441 = smul.u32 %s21, 8
        %s442 = scalar_lea.vmem [#allocation2], %s441
        %v443 = vld [vmem:[%s442] sm:$0xff]
        %v444 = vld [vmem:[#allocation5] sm:$0xff]
        %446 = vset.pattern.permute.xlu0 0
        %447 = vperm.xlu0 %446, %v444
        %v448 = vpop.permute.xlu0 %447
        %v450 = vmul.f32 %v443, %v448
        %v451 = vld [vmem:[#allocation6] sm:$0xff]
        %453 = vset.pattern.permute.xlu0 0
        %454 = vperm.xlu0 %453, %v451
        %v455 = vpop.permute.xlu0 %454
        %v457 = vadd.f32 %v450, %v455
        %458 = vst [vmem:[%s259] sm:$0xff] %v457
      $region56: #{enconv_pallas.1} parent=39 // pred_fallthru
        _
      %s459 = smul.u32 %s21, %s20
      %p460 = scmp.lt.s32.totalorder %s459, 1
      %s461 = scalar_select %p460, %s459, 1
      %s462 = smul.addr %s461, 8
      %s463 = scalar_lea.vmem %s5, %s462
      // Predicated region
      $region57: #{enconv_pallas.1} parent=39 // pred_check
        %p464 = pneg %p164
      $region58: #{enconv_pallas.1} parent=39 // pred_check_branch
        %466 = sbr.rel (%p464) target = $region60
      $region59: #{enconv_pallas.1} parent=39 // pred_region
        %s467 = smul.u32 %s21, %s20
      $region60: #{enconv_pallas.1} parent=39 // pred_fallthru
        _
    $region40: #{enconv_pallas.1} parent=5 // pred_fallthru
      _
    %p468 = scmp.le.s32.totalorder 2, %s11
    // Predicated region
    $region61: #{enconv_pallas.1} parent=5 // pred_check
      %p469 = pneg %p468
    $region62: #{enconv_pallas.1} parent=5 // pred_check_branch
      %471 = sbr.rel (%p469) target = $region64
    $region63: #{enconv_pallas.1} parent=5 // pred_region
      %s472 = ssub.s32 %s11, 2
      // Predicated region
      $region65: #{enconv_pallas.1} parent=63 // pred_check
        %p473 = pneg %p170
      $region66: #{enconv_pallas.1} parent=63 // pred_check_branch
        %475 = sbr.rel (%p473) target = $region68
      $region67: #{enconv_pallas.1} parent=63 // pred_region
        %s476 = smul.u32 %s23, %s22
        %p477 = scmp.lt.s32.totalorder %s476, 1
        %s478 = scalar_select %p477, %s476, 1
        %s479 = smul.addr %s478, 8
        %s480 = scalar_lea.vmem %s5, %s479
      $region68: #{enconv_pallas.1} parent=63 // pred_fallthru
        _
    $region64: #{enconv_pallas.1} parent=5 // pred_fallthru
      _
  $region6: #{enconv_pallas.1} parent=0 // loop_footer
    %s15 = sadd.s32 1, %s11
  $region7: #{enconv_pallas.1} parent=0 // loop_footer_branch
    %10 = sbr.rel target = $region3
  $region8: #{enconv_pallas.1} parent=0 // loop_exit
    _

</llo_original>
